<compile_context>
chip_gen: v7x
topology: tpu7x:2x2x1
jax: 0.10.0
libtpu: 0.0.40
codegen_flags: <defaults>
</compile_context>

<pallas_src>
import functools

import jax
import jax.numpy as jnp
from jax.experimental import pallas as pl
from jax.experimental.pallas import tpu as pltpu

_LANE = 128


def actionnn_kernel(x_ref, w1_ref, b1_ref, w2_ref, b2_ref, o_ref):
    """One batch tile of fc1 -> ReLU -> fc2, batch in lanes.

    x_ref : (ni, T)   input tile, batch-in-lanes (lane-dense)
    w1_ref: (nh, ni)  fc1 weight (PyTorch layout), VMEM-resident across steps
    b1_ref: (nh, 1)   fc1 bias column
    w2_ref: (1, nh)   fc2 weight row
    b2_ref: (1, 1)    fc2 bias
    o_ref : (1, T)    output row, batch-in-lanes (lane-dense)
    """
    # fc1: (nh, ni) @ (ni, T) -> (nh, T).  K=ni is tiny, but the MXU is idle
    # anyway (the kernel is HBM-bound); no NH padding, no transposes.
    h = jnp.dot(w1_ref[...], x_ref[...], preferred_element_type=jnp.float32)
    h = jnp.maximum(h + b1_ref[...], 0.0)                     # bias + ReLU, lane-dense
    # fc2: (1, nh) @ (nh, T) -> (1, T).  Contraction is over the nh sublanes;
    # no cross-lane reduce anywhere.
    out = jnp.dot(w2_ref[...], h, preferred_element_type=jnp.float32) + b2_ref[...]
    o_ref[...] = out.astype(o_ref.dtype)


@functools.partial(jax.jit, static_argnames=("tile_b",))
def actionnn_forward_t(x_t, w1, b1, w2, b2, *, tile_b=65536):
    """ActionNN forward on batch-minor input.

    x_t: (ni, B) float  -- features in sublanes, batch in lanes.
    Returns (B, 1) float32, equal to relu(x @ w1.T + b1) @ w2.T + b2.
    """
    x_t = jnp.asarray(x_t, jnp.float32)
    ni, B = x_t.shape
    nh = w1.shape[0]

    # Parameter layout plumbing (tiny, wrapper-side).
    w1m = jnp.asarray(w1, jnp.float32).reshape(nh, ni)
    b1c = jnp.asarray(b1, jnp.float32).reshape(nh, 1)
    w2r = jnp.asarray(w2, jnp.float32).reshape(1, nh)
    b2c = jnp.asarray(b2, jnp.float32).reshape(1, 1)

    # Lane tile over the batch: a multiple of 128 for interior blocks, or the
    # full batch as a single block.  No batch padding; a ragged final block is
    # handled by Pallas edge-block masking (per-sample independence).
    tile = max(_LANE, (tile_b // _LANE) * _LANE)
    if B <= tile:
        tile = B
    grid = (pl.cdiv(B, tile),)

    flops = 2 * B * ni * nh + 2 * B * nh
    bytes_accessed = 4 * (B * ni + B + nh * ni + 2 * nh + 1)

    out_row = pl.pallas_call(
        actionnn_kernel,
        out_shape=jax.ShapeDtypeStruct((1, B), jnp.float32),
        grid=grid,
        in_specs=[
            pl.BlockSpec((ni, tile), lambda i: (0, i)),   # x: tiled over batch lanes
            pl.BlockSpec((nh, ni), lambda i: (0, 0)),     # w1: VMEM-resident
            pl.BlockSpec((nh, 1), lambda i: (0, 0)),      # b1: VMEM-resident
            pl.BlockSpec((1, nh), lambda i: (0, 0)),      # w2: VMEM-resident
            pl.BlockSpec((1, 1), lambda i: (0, 0)),       # b2: VMEM-resident
        ],
        out_specs=pl.BlockSpec((1, tile), lambda i: (0, i)),
        compiler_params=pltpu.CompilerParams(
            dimension_semantics=("parallel",),            # megacore split on v7x
            vmem_limit_bytes=48 * 1024 * 1024,
        ),
        cost_estimate=pl.CostEstimate(
            flops=flops, transcendentals=0, bytes_accessed=bytes_accessed),
    )(x_t, w1m, b1c, w2r, b2c)
    # (1, B) -> (B, 1) is a free row-major reshape.
    return out_row.reshape(B, 1)


@functools.partial(jax.jit, static_argnames=("tile_b",))
def actionnn_forward(x, w1, b1, w2, b2, *, tile_b=65536):
    """PyTorch-layout entry point: x is (B, ni), params follow nn.Linear.

    The (B, ni) -> (ni, B) transpose here is one wrapper-side pass over x;
    large-batch streaming callers should call actionnn_forward_t directly
    with batch-minor data to avoid it.
    """
    x_t = jnp.asarray(x, jnp.float32).T
    return actionnn_forward_t(x_t, w1, b1, w2, b2, tile_b=tile_b)


def init_params(key, ni, nh):
    # Deterministic init mimicking nn.Linear's uniform(-1/sqrt(fan_in), 1/sqrt(fan_in)).
    k1, k2, k3, k4 = jax.random.split(key, 4)
    lim1 = 1.0 / jnp.sqrt(ni)
    lim2 = 1.0 / jnp.sqrt(nh)
    w1 = jax.random.uniform(k1, (nh, ni), jnp.float32, -lim1, lim1)
    b1 = jax.random.uniform(k2, (nh,), jnp.float32, -lim1, lim1)
    w2 = jax.random.uniform(k3, (1, nh), jnp.float32, -lim2, lim2)
    b2 = jax.random.uniform(k4, (1,), jnp.float32, -lim2, lim2)
    return w1, b1, w2, b2


if __name__ == "__main__":
    key = jax.random.PRNGKey(0)
    kx, kp, kx2 = jax.random.split(key, 3)

    ni, nh, batch = 4, 10, 8
    w1, b1, w2, b2 = init_params(kp, ni, nh)

    def ref_fwd(xx):
        return jnp.maximum(xx @ w1.T + b1, 0.0) @ w2.T + b2

    # Deployment-sized batch: single block, lane dim == full batch.
    x = jax.random.normal(kx, (batch, ni), jnp.float32)
    out = jax.block_until_ready(actionnn_forward(x, w1, b1, w2, b2))
    assert out.shape == (batch, 1)
    assert jnp.allclose(out, ref_fwd(x), atol=1e-5, rtol=1e-5)

    # Multi-block + ragged final block: exercises the cdiv grid / edge masking.
    batch2 = 1000
    x2 = jax.random.normal(kx2, (batch2, ni), jnp.float32)
    out2 = jax.block_until_ready(actionnn_forward(x2, w1, b1, w2, b2, tile_b=256))
    assert out2.shape == (batch2, 1)
    assert jnp.allclose(out2, ref_fwd(x2), atol=1e-5, rtol=1e-5)

    print("KERNEL_OK")
</pallas_src>

<mosaic_0001>
module attributes {stable_mosaic.version = 11 : i64} {
  func.func @actionnn_kernel(%arg0: i32, %arg1: memref<4x8xf32, #tpu.memory_space<vmem>>, %arg2: memref<10x4xf32, #tpu.memory_space<vmem>>, %arg3: memref<10x1xf32, #tpu.memory_space<vmem>>, %arg4: memref<1x10xf32, #tpu.memory_space<vmem>>, %arg5: memref<1x1xf32, #tpu.memory_space<vmem>>, %arg6: memref<1x8xf32, #tpu.memory_space<vmem>>) attributes {dimension_semantics = [#tpu.dimension_semantics<parallel>], iteration_bounds = array<i64: 1>, scalar_prefetch = 0 : i64, scratch_operands = 0 : i64, tpu.core_type = #tpu.core_type<tc>, window_params = [{transform_indices = @transform_0, window_bounds = array<i64: 4, 8>}, {pipeline_mode = #tpu.pipeline_mode<synchronous>, transform_indices = @transform_1, window_bounds = array<i64: 10, 4>}, {pipeline_mode = #tpu.pipeline_mode<synchronous>, transform_indices = @transform_2, window_bounds = array<i64: 10, 1>}, {pipeline_mode = #tpu.pipeline_mode<synchronous>, transform_indices = @transform_3, window_bounds = array<i64: 1, 10>}, {pipeline_mode = #tpu.pipeline_mode<synchronous>, transform_indices = @transform_4, window_bounds = array<i64: 1, 1>}, {transform_indices = @transform_5, window_bounds = array<i64: 1, 8>}]} {
    %c0 = arith.constant 0 : index
    %c0_0 = arith.constant 0 : index
    %0 = vector.load %arg2[%c0, %c0_0] : memref<10x4xf32, #tpu.memory_space<vmem>>, vector<10x4xf32>
    %c0_1 = arith.constant 0 : index
    %c0_2 = arith.constant 0 : index
    %1 = vector.load %arg1[%c0_1, %c0_2] : memref<4x8xf32, #tpu.memory_space<vmem>>, vector<4x8xf32>
    %cst = arith.constant dense<0.000000e+00> : vector<10x8xf32>
    %2 = tpu.matmul %0, %1, %cst {dimension_numbers = #tpu.dot_dimension_numbers<[1], [0], [0], [1], [0, 0, 1, 1], [], []>} : vector<10x4xf32>, vector<4x8xf32>, vector<10x8xf32> -> vector<10x8xf32>
    %c0_3 = arith.constant 0 : index
    %c0_4 = arith.constant 0 : index
    %3 = vector.load %arg3[%c0_3, %c0_4] : memref<10x1xf32, #tpu.memory_space<vmem>>, vector<10x1xf32>
    %4 = vector.broadcast %3 : vector<10x1xf32> to vector<10x8xf32>
    %5 = arith.addf %2, %4 : vector<10x8xf32>
    %cst_5 = arith.constant 0.000000e+00 : f32
    %6 = vector.broadcast %cst_5 : f32 to vector<10x8xf32>
    %7 = arith.maximumf %5, %6 : vector<10x8xf32>
    %c0_6 = arith.constant 0 : index
    %c0_7 = arith.constant 0 : index
    %8 = vector.load %arg4[%c0_6, %c0_7] : memref<1x10xf32, #tpu.memory_space<vmem>>, vector<1x10xf32>
    %cst_8 = arith.constant dense<0.000000e+00> : vector<1x8xf32>
    %9 = tpu.matmul %8, %7, %cst_8 {dimension_numbers = #tpu.dot_dimension_numbers<[1], [0], [0], [1], [0, 0, 1, 1], [], []>} : vector<1x10xf32>, vector<10x8xf32>, vector<1x8xf32> -> vector<1x8xf32>
    %c0_9 = arith.constant 0 : index
    %c0_10 = arith.constant 0 : index
    %10 = vector.load %arg5[%c0_9, %c0_10] : memref<1x1xf32, #tpu.memory_space<vmem>>, vector<1x1xf32>
    %11 = vector.broadcast %10 : vector<1x1xf32> to vector<1x8xf32>
    %12 = arith.addf %9, %11 : vector<1x8xf32>
    %c0_11 = arith.constant 0 : index
    %c0_12 = arith.constant 0 : index
    %13 = vector.load %arg6[%c0_11, %c0_12] : memref<1x8xf32, #tpu.memory_space<vmem>>, vector<1x8xf32>
    tpu.vector_store %arg6[%c0_11, %c0_12], %12 {strides = array<i32>} : memref<1x8xf32, #tpu.memory_space<vmem>>, vector<1x8xf32>,
    return
  }
  func.func @transform_0(%arg0: i32) -> (i32, i32) {
    %c0_i32 = arith.constant 0 : i32
    %c0_i32_0 = arith.constant 0 : i32
    return %c0_i32, %arg0 : i32, i32
  }
  func.func @transform_1(%arg0: i32) -> (i32, i32) {
    %c0_i32 = arith.constant 0 : i32
    %c0_i32_0 = arith.constant 0 : i32
    %c0_i32_1 = arith.constant 0 : i32
    return %c0_i32, %c0_i32_0 : i32, i32
  }
  func.func @transform_2(%arg0: i32) -> (i32, i32) {
    %c0_i32 = arith.constant 0 : i32
    %c0_i32_0 = arith.constant 0 : i32
    %c0_i32_1 = arith.constant 0 : i32
    return %c0_i32, %c0_i32_0 : i32, i32
  }
  func.func @transform_3(%arg0: i32) -> (i32, i32) {
    %c0_i32 = arith.constant 0 : i32
    %c0_i32_0 = arith.constant 0 : i32
    %c0_i32_1 = arith.constant 0 : i32
    return %c0_i32, %c0_i32_0 : i32, i32
  }
  func.func @transform_4(%arg0: i32) -> (i32, i32) {
    %c0_i32 = arith.constant 0 : i32
    %c0_i32_0 = arith.constant 0 : i32
    %c0_i32_1 = arith.constant 0 : i32
    return %c0_i32, %c0_i32_0 : i32, i32
  }
  func.func @transform_5(%arg0: i32) -> (i32, i32) {
    %c0_i32 = arith.constant 0 : i32
    %c0_i32_0 = arith.constant 0 : i32
    return %c0_i32, %arg0 : i32, i32
  }
}

</mosaic_0001>

<llo_original>
// kernel: actionnn_forward_t.1
$region0: #{actionnn_forward_t.1}
  #allocation0 [shape = 'u32[]', space=smem, size = 0x4, offset = 0x4, fixed_abs, tag = 'smem constant byte address 0x4 - core index']
  #allocation1 [shape = 'u32[144,128]{1,0:T(1,128)}', space=vmem, size = 0x12000, scoped, tag = 'internal scratch']
  #allocation2 [shape = 'f32[1,1]{1,0:T(1,128)S(1)}', space=vmem, size = 0x200, scoped, tag = 'scoped memory for actionnn_forward_t.1']
  %s0 = inlined_call_operand.vmem [shape: f32[4,8], index: 0, kind: input, shape index: {}]
  %s1 = inlined_call_operand.vmem [shape: f32[10,4], index: 1, kind: input, shape index: {}]
  %s2 = inlined_call_operand.vmem [shape: f32[10,1], index: 2, kind: input, shape index: {}]
  %s3 = inlined_call_operand.vmem [shape: f32[1,10], index: 3, kind: input, shape index: {}]
  %s4 = inlined_call_operand.<no memory space> [shape: f32[1,1], index: 4, kind: input, shape index: {}]
  %s5 = inlined_call_operand.hbm [shape: f32[1,8], index: 5, kind: output, shape index: {}]
  %s6 = sld [smem:[#allocation0]]
  $region30: #{actionnn_forward_t.1} parent=0
    _
  %s8 = ssub.s32 1, %s6
  %s9 = scalar_select 0, %s8, %s6
  %v10 = vstv %s4
  %11 = vst [vmem:[#allocation2] sm:$0x1] %v10
  $region1: #{actionnn_forward_t.1} parent=0
    #allocation3 [shape = 'u8[512]{0}', space=vmem, size = 0x400, scoped, tag = 'output window, operand 0, single buffered']
    #allocation4 [shape = 's32[1]{0}', space=sflag, size = 0x4, scoped, tag = 'scoped memory for actionnn_forward_t.1']
    %12 = vsyncpa [#allocation4], 0
    // Predicated region
    $region2: #{actionnn_forward_t.1} parent=1 // pred_check
      _
    $region3: #{actionnn_forward_t.1} parent=1 // pred_check_branch
      %14 = sbr.rel (0) target = $region5
    $region4: #{actionnn_forward_t.1} parent=1 // pred_region
      _
    $region5: #{actionnn_forward_t.1} parent=1 // pred_fallthru
      _
    // Predicated region
    $region6: #{actionnn_forward_t.1} parent=1 // pred_check
      _
    $region7: #{actionnn_forward_t.1} parent=1 // pred_check_branch
      %16 = sbr.rel (0) target = $region9
    $region8: #{actionnn_forward_t.1} parent=1 // pred_region
      _
    $region9: #{actionnn_forward_t.1} parent=1 // pred_fallthru
      _
    // Predicated region
    $region10: #{actionnn_forward_t.1} parent=1 // pred_check
      _
    $region11: #{actionnn_forward_t.1} parent=1 // pred_check_branch
      %18 = sbr.rel (0) target = $region13
    $region12: #{actionnn_forward_t.1} parent=1 // pred_region
      _
    $region13: #{actionnn_forward_t.1} parent=1 // pred_fallthru
      _
    // Predicated region
    $region14: #{actionnn_forward_t.1} parent=1 // pred_check
      _
    $region15: #{actionnn_forward_t.1} parent=1 // pred_check_branch
      %20 = sbr.rel (0) target = $region17
    $region16: #{actionnn_forward_t.1} parent=1 // pred_region
      _
    $region17: #{actionnn_forward_t.1} parent=1 // pred_fallthru
      _
    // Predicated region
    $region18: #{actionnn_forward_t.1} parent=1 // pred_check
      _
    $region19: #{actionnn_forward_t.1} parent=1 // pred_check_branch
      %22 = sbr.rel (0) target = $region21
    $region20: #{actionnn_forward_t.1} parent=1 // pred_region
      _
    $region21: #{actionnn_forward_t.1} parent=1 // pred_fallthru
      _
    %v23 = vld [vmem:[%s1] sm:$0xff]
    %v24 = vld [vmem:[%s1 + $0x8] sm:$0x3]
    %v25 = vld [vmem:[%s0] sm:$0xf]
    %v26 = vld [vmem:[%s2] sm:$0xff]
    %v27 = vld [vmem:[%s2 + $0x8] sm:$0x3]
    %29 = vset.pattern.permute.xlu0 0
    %30 = vperm.xlu0 %29, %v26
    %v31 = vpop.permute.xlu0 %30
    %34 = vset.pattern.permute.xlu0 0
    %35 = vperm.xlu0 %34, %v27
    %v36 = vpop.permute.xlu0 %35
    %vm38 = vcmask 31744
    %v40 = vsel %vm38, %v23, 0
    %v43 = vsel %vm38, %v24, 0
    %vm45 = vcmask 1043456
    %v47 = vsel %vm45, %v25, 0
    %49 = vmatprep.subr.mxu0 0.0
    %50 = vmatpush1.msra.mxu0 %v47
    %51 = vmatprep.subr.mxu0 0.0
    %52 = vmatpush1.msra.mxu0 0.0
    %53 = vmatprep.subr.mxu0 0.0
    %54 = vmatpush1.msra.mxu0 0.0
    %55 = vmatprep.subr.mxu0 0.0
    %56 = vmatpush1.msra.mxu0 0.0
    %57 = vmatprep.subr.mxu0 0.0
    %58 = vmatpush1.msra.mxu0 0.0
    %59 = vmatprep.subr.mxu0 0.0
    %60 = vmatpush1.msra.mxu0 0.0
    %61 = vmatprep.subr.mxu0 0.0
    %62 = vmatpush1.msra.mxu0 0.0
    %63 = vmatprep.subr.mxu0 0.0
    %64 = vmatpush1.msra.mxu0 0.0
    %65 = vmatprep.subr.mxu0 0.0
    %66 = vmatpush1.msra.mxu0 0.0
    %67 = vmatprep.subr.mxu0 0.0
    %68 = vmatpush1.msra.mxu0 0.0
    %69 = vmatprep.subr.mxu0 0.0
    %70 = vmatpush1.msra.mxu0 0.0
    %71 = vmatprep.subr.mxu0 0.0
    %72 = vmatpush1.msra.mxu0 0.0
    %73 = vmatprep.subr.mxu0 0.0
    %74 = vmatpush1.msra.mxu0 0.0
    %75 = vmatprep.subr.mxu0 0.0
    %76 = vmatpush1.msra.mxu0 0.0
    %77 = vmatprep.subr.mxu0 0.0
    %78 = vmatpush1.msra.mxu0 0.0
    %79 = vmatprep.subr.mxu0 0.0
    %80 = vmatpush1.msra.mxu0 0.0
    %81 = vmatprep.subr.mxu0 0.0
    %82 = vmatpush1.msra.mxu0 0.0
    %83 = vmatprep.subr.mxu0 0.0
    %84 = vmatpush1.msra.mxu0 0.0
    %85 = vmatprep.subr.mxu0 0.0
    %86 = vmatpush1.msra.mxu0 0.0
    %87 = vmatprep.subr.mxu0 0.0
    %88 = vmatpush1.msra.mxu0 0.0
    %89 = vmatprep.subr.mxu0 0.0
    %90 = vmatpush1.msra.mxu0 0.0
    %91 = vmatprep.subr.mxu0 0.0
    %92 = vmatpush1.msra.mxu0 0.0
    %93 = vmatprep.subr.mxu0 0.0
    %94 = vmatpush1.msra.mxu0 0.0
    %95 = vmatprep.subr.mxu0 0.0
    %96 = vmatpush1.msra.mxu0 0.0
    %97 = vmatprep.subr.mxu0 0.0
    %98 = vmatpush1.msra.mxu0 0.0
    %99 = vmatprep.subr.mxu0 0.0
    %100 = vmatpush1.msra.mxu0 0.0
    %101 = vmatprep.subr.mxu0 0.0
    %102 = vmatpush1.msra.mxu0 0.0
    %103 = vmatprep.subr.mxu0 0.0
    %104 = vmatpush1.msra.mxu0 0.0
    %105 = vmatprep.subr.mxu0 0.0
    %106 = vmatpush1.msra.mxu0 0.0
    %107 = vmatprep.subr.mxu0 0.0
    %108 = vmatpush1.msra.mxu0 0.0
    %109 = vmatprep.subr.mxu0 0.0
    %110 = vmatpush1.msra.mxu0 0.0
    %111 = vmatprep.subr.mxu0 0.0
    %112 = vmatpush1.msra.mxu0 0.0
    %113 = vmatprep.mubr.f32.mxu0 0.0
    %114 = vmatmul.mubr.f32.gmra.mrb[0].mxu0 %v40
    %v115 = vpop.f32.mrb[0].mxu0
    %v116 = vadd.f32 %v31, %v115
    %v117 = vpop.f32.mrb[0].mxu0
    %118 = vmatprep.mubr.f32.mxu0 0.0
    %119 = vmatmul.mubr.f32.gmra.mrb[0].mxu0 %v43
    %v120 = vpop.f32.mrb[0].mxu0
    %v121 = vadd.f32 %v36, %v120
    %v122 = vpop.f32.mrb[0].mxu0
    %123 = vdwg.mxu0
    %v124 = vmax.f32 %v116, 0.0
    %v125 = vmax.f32 %v121, 0.0
    %v126 = vld [vmem:[%s3] sm:$0x1]
    %v127 = vld [vmem:[#allocation2] sm:$0x1]
    %129 = vset.pattern.permute.xlu0 0
    %130 = vperm.xlu0 %129, %v127
    %v131 = vpop.permute.xlu0 %130
    %v133 = vlaneseq
    %v134 = vshrl.u32 %v133, 7
    %v135 = vsub.s32 0, %v134
    %v136 = vrot.slane %v131, %v135
    %vm137 = vcmask 80896
    %v139 = vsel %vm137, %v126, 0
    %vm141 = vcmask 1041408
    %v143 = vsel %vm141, %v125, 0
    %145 = vmatprep.subr.mxu0 0.0
    %146 = vmatpush1.msra.mxu0 %v124
    %147 = vmatprep.subr.mxu0 0.0
    %148 = vmatpush1.msra.mxu0 %v143
    %149 = vmatprep.subr.mxu0 0.0
    %150 = vmatpush1.msra.mxu0 0.0
    %151 = vmatprep.subr.mxu0 0.0
    %152 = vmatpush1.msra.mxu0 0.0
    %153 = vmatprep.subr.mxu0 0.0
    %154 = vmatpush1.msra.mxu0 0.0
    %155 = vmatprep.subr.mxu0 0.0
    %156 = vmatpush1.msra.mxu0 0.0
    %157 = vmatprep.subr.mxu0 0.0
    %158 = vmatpush1.msra.mxu0 0.0
    %159 = vmatprep.subr.mxu0 0.0
    %160 = vmatpush1.msra.mxu0 0.0
    %161 = vmatprep.subr.mxu0 0.0
    %162 = vmatpush1.msra.mxu0 0.0
    %163 = vmatprep.subr.mxu0 0.0
    %164 = vmatpush1.msra.mxu0 0.0
    %165 = vmatprep.subr.mxu0 0.0
    %166 = vmatpush1.msra.mxu0 0.0
    %167 = vmatprep.subr.mxu0 0.0
    %168 = vmatpush1.msra.mxu0 0.0
    %169 = vmatprep.subr.mxu0 0.0
    %170 = vmatpush1.msra.mxu0 0.0
    %171 = vmatprep.subr.mxu0 0.0
    %172 = vmatpush1.msra.mxu0 0.0
    %173 = vmatprep.subr.mxu0 0.0
    %174 = vmatpush1.msra.mxu0 0.0
    %175 = vmatprep.subr.mxu0 0.0
    %176 = vmatpush1.msra.mxu0 0.0
    %177 = vmatprep.subr.mxu0 0.0
    %178 = vmatpush1.msra.mxu0 0.0
    %179 = vmatprep.subr.mxu0 0.0
    %180 = vmatpush1.msra.mxu0 0.0
    %181 = vmatprep.subr.mxu0 0.0
    %182 = vmatpush1.msra.mxu0 0.0
    %183 = vmatprep.subr.mxu0 0.0
    %184 = vmatpush1.msra.mxu0 0.0
    %185 = vmatprep.subr.mxu0 0.0
    %186 = vmatpush1.msra.mxu0 0.0
    %187 = vmatprep.subr.mxu0 0.0
    %188 = vmatpush1.msra.mxu0 0.0
    %189 = vmatprep.subr.mxu0 0.0
    %190 = vmatpush1.msra.mxu0 0.0
    %191 = vmatprep.subr.mxu0 0.0
    %192 = vmatpush1.msra.mxu0 0.0
    %193 = vmatprep.subr.mxu0 0.0
    %194 = vmatpush1.msra.mxu0 0.0
    %195 = vmatprep.subr.mxu0 0.0
    %196 = vmatpush1.msra.mxu0 0.0
    %197 = vmatprep.subr.mxu0 0.0
    %198 = vmatpush1.msra.mxu0 0.0
    %199 = vmatprep.subr.mxu0 0.0
    %200 = vmatpush1.msra.mxu0 0.0
    %201 = vmatprep.subr.mxu0 0.0
    %202 = vmatpush1.msra.mxu0 0.0
    %203 = vmatprep.subr.mxu0 0.0
    %204 = vmatpush1.msra.mxu0 0.0
    %205 = vmatprep.subr.mxu0 0.0
    %206 = vmatpush1.msra.mxu0 0.0
    %207 = vmatprep.subr.mxu0 0.0
    %208 = vmatpush1.msra.mxu0 0.0
    %209 = vmatprep.mubr.f32.mxu0 0.0
    %210 = vmatmul.mubr.f32.gmra.mrb[0].mxu0 %v139
    %v211 = vpop.f32.mrb[0].mxu0
    %v212 = vadd.f32 %v136, %v211
    %v213 = vpop.f32.mrb[0].mxu0
    %214 = vdwg.mxu0
    %vm215 = vcmask 57344
    %216 = vst.msk [vmem:[#allocation3] sm:$0x1] %vm215, %v212
    // Predicated region
    $region22: #{actionnn_forward_t.1} parent=1 // pred_check
      _
    $region23: #{actionnn_forward_t.1} parent=1 // pred_check_branch
      %218 = sbr.rel (0) target = $region25
    $region24: #{actionnn_forward_t.1} parent=1 // pred_region
      %s220 = ssub.s32 16, 16
      %221 = vsyncadd [#allocation4], %s220
      %s223 = sshll.u32 [#allocation3], 4
      %s224 = int_to_ptr.vmem [resolvable:$true] %s223
      %226 = dma.vmem_to_hbm [thread:$0]  %s224, 16, %s5, [#allocation4]
    $region25: #{actionnn_forward_t.1} parent=1 // pred_fallthru
      _
    // Predicated region
    $region26: #{actionnn_forward_t.1} parent=1 // pred_check
      _
    $region27: #{actionnn_forward_t.1} parent=1 // pred_check_branch
      %228 = sbr.rel (0) target = $region29
    $region28: #{actionnn_forward_t.1} parent=1 // pred_region
      %229 = dma.done [#allocation4], 16
    $region29: #{actionnn_forward_t.1} parent=1 // pred_fallthru
      _
    %230 = vsyncpa [#allocation4], 1

</llo_original>
